<compile_context>
chip_gen: v7x
topology: tpu7x:2x2x1
jax: 0.10.0
libtpu: 0.0.40
codegen_flags: <defaults>
</compile_context>

<pallas_src>
import functools

import jax
import jax.numpy as jnp
from jax.experimental import pallas as pl
from jax.experimental.pallas import tpu as pltpu

VOCAB = 100
VOCAB_PAD = 128      # vocab rounded up to lane width for the one-hot matmul
HIDDEN = 32          # backbone hidden_size
FC1_OUT = 128        # nn.Linear(hidden_size, 128)
N_CLASSES = 4
HEAD_PAD = 128       # classifier head padded to lane width (cols >= N_CLASSES are zero)
DROP_P = 0.2


def _round_up(x, m):
    return ((x + m - 1) // m) * m


def _head_kernel(train, ids_ref, mask_ref, emb_ref, w1_ref, b1_ref,
                 w2_ref, b2_ref, seed_ref, o_ref):
    """Fused: embedding gather + masked mean-pool (one-hot @ E on the MXU)
    -> fc1 -> ReLU -> dropout -> lane-padded fc_out."""
    ids = ids_ref[...]                       # [bB, S] int32
    mask = mask_ref[...]                     # [bB, S] f32
    bB, S = ids.shape

    # Mask-weighted one-hot token counts: counts[b, v] = sum_s mask[b,s]*(ids[b,s]==v)
    vocab_row = jax.lax.broadcasted_iota(jnp.int32, (bB, VOCAB_PAD), 1)
    counts = jnp.zeros((bB, VOCAB_PAD), jnp.float32)
    for s in range(S):                       # S is small & static -> unrolled at trace time
        counts = counts + jnp.where(ids[:, s:s + 1] == vocab_row,
                                    mask[:, s:s + 1], 0.0)

    denom = jnp.maximum(jnp.sum(mask, axis=1, keepdims=True), 1.0)          # [bB, 1]

    # masked mean-pool == (counts @ E) / denom  (MXU, K = 128 lane-dense)
    pooled = jnp.dot(counts.astype(jnp.bfloat16), emb_ref[...],
                     preferred_element_type=jnp.float32) / denom            # [bB, H] f32

    # fc1 + ReLU
    h = jnp.dot(pooled.astype(jnp.bfloat16), w1_ref[...],
                preferred_element_type=jnp.float32) + b1_ref[...]           # [bB, 128]
    h = jnp.maximum(h, 0.0)

    # dropout(p=0.2) — training mode only (eval mode == identity).
    if train:
        pltpu.prng_seed(seed_ref[0] + pl.program_id(0))   # distinct stream per batch tile
        bits = pltpu.bitcast(pltpu.prng_random_bits(h.shape), jnp.uint32)
        keep = bits >= jnp.uint32(int(round(DROP_P * (1 << 32))))
        h = jnp.where(keep, h * (1.0 / (1.0 - DROP_P)), 0.0)

    # final classifier layer, padded to 128 lanes (real logits = cols [:N_CLASSES])
    logits = jnp.dot(h.astype(jnp.bfloat16), w2_ref[...],
                     preferred_element_type=jnp.float32) + b2_ref[...]      # [bB, 128]
    o_ref[...] = logits.astype(o_ref.dtype)


def vanilla_classifier_forward(params, input_ids1, attention_mask1,
                               input_ids2=None, attention_mask2=None,
                               *, train=False, seed=0, block_b=256):
    # TODO(synk): input_ids2 / attention_mask2 are unused, matching the reference forward().
    B, S = input_ids1.shape
    block_b = min(block_b, _round_up(max(B, 1), 8))   # 8-row aligned batch tiles
    Bp = _round_up(B, block_b)

    ids = jnp.zeros((Bp, S), jnp.int32).at[:B].set(input_ids1.astype(jnp.int32))
    mask = jnp.zeros((Bp, S), jnp.float32).at[:B].set(attention_mask1.astype(jnp.float32))

    # Weights: cast matmul operands to bf16, zero-pad vocab and head to lane width.
    emb_pad = jnp.zeros((VOCAB_PAD, HIDDEN), jnp.float32).at[:VOCAB].set(
        params["embedding"]).astype(jnp.bfloat16)
    w1 = params["w1"].astype(jnp.bfloat16)
    b1 = params["b1"].astype(jnp.float32)
    w2_pad = jnp.zeros((FC1_OUT, HEAD_PAD), jnp.float32).at[:, :N_CLASSES].set(
        params["w2"]).astype(jnp.bfloat16)
    b2_pad = jnp.zeros((1, HEAD_PAD), jnp.float32).at[:, :N_CLASSES].set(params["b2"])
    seed_arr = jnp.array([seed], dtype=jnp.int32)

    kernel = functools.partial(_head_kernel, train)
    grid = (Bp // block_b,)

    out = pl.pallas_call(
        kernel,
        out_shape=jax.ShapeDtypeStruct((Bp, HEAD_PAD), jnp.float32),
        grid=grid,
        in_specs=[
            pl.BlockSpec((block_b, S), lambda i: (i, 0)),          # ids (tiled over batch)
            pl.BlockSpec((block_b, S), lambda i: (i, 0)),          # mask (tiled over batch)
            pl.BlockSpec((VOCAB_PAD, HIDDEN), lambda i: (0, 0)),   # embedding table (resident)
            pl.BlockSpec((HIDDEN, FC1_OUT), lambda i: (0, 0)),     # w1
            pl.BlockSpec((1, FC1_OUT), lambda i: (0, 0)),          # b1
            pl.BlockSpec((FC1_OUT, HEAD_PAD), lambda i: (0, 0)),   # w2 (lane-padded)
            pl.BlockSpec((1, HEAD_PAD), lambda i: (0, 0)),         # b2 (lane-padded)
            pl.BlockSpec(memory_space=pltpu.MemorySpace.SMEM),     # seed scalar
        ],
        out_specs=pl.BlockSpec((block_b, HEAD_PAD), lambda i: (i, 0)),
        compiler_params=pltpu.CompilerParams(
            dimension_semantics=("parallel",)),
    )(ids, mask, emb_pad, w1, b1, w2_pad, b2_pad, seed_arr)

    return out[:B, :N_CLASSES]


def init_params(key):
    k_emb, k_w1, k_b1, k_w2, k_b2 = jax.random.split(key, 5)
    return {
        "embedding": jax.random.normal(k_emb, (VOCAB, HIDDEN), jnp.float32) * 0.02,
        # fc1: Linear(hidden_size, 128) stored as [in, out]
        "w1": jax.random.normal(k_w1, (HIDDEN, FC1_OUT), jnp.float32) * (1.0 / HIDDEN ** 0.5),
        "b1": jax.random.normal(k_b1, (1, FC1_OUT), jnp.float32) * 0.01,
        # final layer: Linear(128, n_classes)
        "w2": jax.random.normal(k_w2, (FC1_OUT, N_CLASSES), jnp.float32) * (1.0 / FC1_OUT ** 0.5),
        "b2": jax.random.normal(k_b2, (1, N_CLASSES), jnp.float32) * 0.01,
    }


if __name__ == "__main__":
    root = jax.random.PRNGKey(0)
    k_params, k_ids1, k_ids2 = jax.random.split(root, 3)
    params = init_params(k_params)

    B, S = 2, 8
    input_ids1 = jax.random.randint(k_ids1, (B, S), 0, VOCAB, dtype=jnp.int32)
    input_ids2 = jax.random.randint(k_ids2, (B, S), 0, VOCAB, dtype=jnp.int32)
    attention_mask1 = jnp.ones((B, S), jnp.float32).at[1, 6:].set(0.0)  # ragged mask
    attention_mask2 = jnp.ones((B, S), jnp.float32)

    logits = vanilla_classifier_forward(
        params, input_ids1, attention_mask1, input_ids2, attention_mask2,
        train=False, seed=0)
    logits = jax.block_until_ready(logits)

    # pure-JAX reference (eval mode: dropout == identity), emulating the kernel's
    # bf16 matmul operands with f32 accumulation.
    bf = lambda x: x.astype(jnp.bfloat16).astype(jnp.float32)
    hp = jax.lax.Precision.HIGHEST
    emb = bf(params["embedding"])[input_ids1]
    denom = jnp.maximum(attention_mask1.sum(1, keepdims=True), 1.0)
    pooled = (emb * attention_mask1[:, :, None]).sum(1) / denom
    h = jnp.maximum(jnp.dot(bf(pooled), bf(params["w1"]), precision=hp) + params["b1"], 0.0)
    ref = jnp.dot(bf(h), bf(params["w2"]), precision=hp) + params["b2"]

    assert logits.shape == (B, N_CLASSES)
    assert jnp.allclose(logits, ref, atol=1e-3), (logits, ref)

    print("KERNEL_OK")
</pallas_src>

<mosaic_0001>
module attributes {stable_mosaic.version = 11 : i64} {
  func.func @_head_kernel(%arg0: i32, %arg1: memref<8x8xi32, #tpu.memory_space<vmem>>, %arg2: memref<8x8xf32, #tpu.memory_space<vmem>>, %arg3: memref<128x32xbf16, #tpu.memory_space<vmem>>, %arg4: memref<32x128xbf16, #tpu.memory_space<vmem>>, %arg5: memref<1x128xf32, #tpu.memory_space<vmem>>, %arg6: memref<128x128xbf16, #tpu.memory_space<vmem>>, %arg7: memref<1x128xf32, #tpu.memory_space<vmem>>, %arg8: memref<1xi32, #tpu.memory_space<smem>>, %arg9: memref<8x128xf32, #tpu.memory_space<vmem>>) attributes {dimension_semantics = [#tpu.dimension_semantics<parallel>], iteration_bounds = array<i64: 1>, scalar_prefetch = 0 : i64, scratch_operands = 0 : i64, tpu.core_type = #tpu.core_type<tc>, window_params = [{transform_indices = @transform_0, window_bounds = array<i64: 8, 8>}, {transform_indices = @transform_1, window_bounds = array<i64: 8, 8>}, {pipeline_mode = #tpu.pipeline_mode<synchronous>, transform_indices = @transform_2, window_bounds = array<i64: 128, 32>}, {pipeline_mode = #tpu.pipeline_mode<synchronous>, transform_indices = @transform_3, window_bounds = array<i64: 32, 128>}, {pipeline_mode = #tpu.pipeline_mode<synchronous>, transform_indices = @transform_4, window_bounds = array<i64: 1, 128>}, {pipeline_mode = #tpu.pipeline_mode<synchronous>, transform_indices = @transform_5, window_bounds = array<i64: 128, 128>}, {pipeline_mode = #tpu.pipeline_mode<synchronous>, transform_indices = @transform_6, window_bounds = array<i64: 1, 128>}, {transform_indices = @transform_7, window_bounds = array<i64: 1>}, {transform_indices = @transform_8, window_bounds = array<i64: 8, 128>}]} {
    %c0 = arith.constant 0 : index
    %c0_0 = arith.constant 0 : index
    %0 = vector.load %arg1[%c0, %c0_0] : memref<8x8xi32, #tpu.memory_space<vmem>>, vector<8x8xi32>
    %c0_1 = arith.constant 0 : index
    %c0_2 = arith.constant 0 : index
    %1 = vector.load %arg2[%c0_1, %c0_2] : memref<8x8xf32, #tpu.memory_space<vmem>>, vector<8x8xf32>
    %2 = tpu.iota {dimensions = array<i32: 1>} : vector<8x128xi32>
    %cst = arith.constant 0.000000e+00 : f32
    %3 = vector.broadcast %cst : f32 to vector<8x128xf32>
    %4 = vector.extract_strided_slice %0 {offsets = [0, 0], sizes = [8, 1], strides = [1, 1]} : vector<8x8xi32> to vector<8x1xi32>
    %5 = vector.broadcast %4 : vector<8x1xi32> to vector<8x128xi32>
    %6 = arith.cmpi eq, %5, %2 : vector<8x128xi32>
    %7 = vector.extract_strided_slice %1 {offsets = [0, 0], sizes = [8, 1], strides = [1, 1]} : vector<8x8xf32> to vector<8x1xf32>
    %cst_3 = arith.constant 0.000000e+00 : f32
    %8 = vector.shape_cast %7 : vector<8x1xf32> to vector<8x1xf32>
    %9 = vector.broadcast %8 : vector<8x1xf32> to vector<8x128xf32>
    %10 = vector.broadcast %cst_3 : f32 to vector<8x128xf32>
    %11 = arith.select %6, %9, %10 : vector<8x128xi1>, vector<8x128xf32>
    %12 = arith.addf %3, %11 : vector<8x128xf32>
    %13 = vector.extract_strided_slice %0 {offsets = [0, 1], sizes = [8, 1], strides = [1, 1]} : vector<8x8xi32> to vector<8x1xi32>
    %14 = vector.broadcast %13 : vector<8x1xi32> to vector<8x128xi32>
    %15 = arith.cmpi eq, %14, %2 : vector<8x128xi32>
    %16 = vector.extract_strided_slice %1 {offsets = [0, 1], sizes = [8, 1], strides = [1, 1]} : vector<8x8xf32> to vector<8x1xf32>
    %cst_4 = arith.constant 0.000000e+00 : f32
    %17 = vector.shape_cast %16 : vector<8x1xf32> to vector<8x1xf32>
    %18 = vector.broadcast %17 : vector<8x1xf32> to vector<8x128xf32>
    %19 = vector.broadcast %cst_4 : f32 to vector<8x128xf32>
    %20 = arith.select %15, %18, %19 : vector<8x128xi1>, vector<8x128xf32>
    %21 = arith.addf %12, %20 : vector<8x128xf32>
    %22 = vector.extract_strided_slice %0 {offsets = [0, 2], sizes = [8, 1], strides = [1, 1]} : vector<8x8xi32> to vector<8x1xi32>
    %23 = vector.broadcast %22 : vector<8x1xi32> to vector<8x128xi32>
    %24 = arith.cmpi eq, %23, %2 : vector<8x128xi32>
    %25 = vector.extract_strided_slice %1 {offsets = [0, 2], sizes = [8, 1], strides = [1, 1]} : vector<8x8xf32> to vector<8x1xf32>
    %cst_5 = arith.constant 0.000000e+00 : f32
    %26 = vector.shape_cast %25 : vector<8x1xf32> to vector<8x1xf32>
    %27 = vector.broadcast %26 : vector<8x1xf32> to vector<8x128xf32>
    %28 = vector.broadcast %cst_5 : f32 to vector<8x128xf32>
    %29 = arith.select %24, %27, %28 : vector<8x128xi1>, vector<8x128xf32>
    %30 = arith.addf %21, %29 : vector<8x128xf32>
    %31 = vector.extract_strided_slice %0 {offsets = [0, 3], sizes = [8, 1], strides = [1, 1]} : vector<8x8xi32> to vector<8x1xi32>
    %32 = vector.broadcast %31 : vector<8x1xi32> to vector<8x128xi32>
    %33 = arith.cmpi eq, %32, %2 : vector<8x128xi32>
    %34 = vector.extract_strided_slice %1 {offsets = [0, 3], sizes = [8, 1], strides = [1, 1]} : vector<8x8xf32> to vector<8x1xf32>
    %cst_6 = arith.constant 0.000000e+00 : f32
    %35 = vector.shape_cast %34 : vector<8x1xf32> to vector<8x1xf32>
    %36 = vector.broadcast %35 : vector<8x1xf32> to vector<8x128xf32>
    %37 = vector.broadcast %cst_6 : f32 to vector<8x128xf32>
    %38 = arith.select %33, %36, %37 : vector<8x128xi1>, vector<8x128xf32>
    %39 = arith.addf %30, %38 : vector<8x128xf32>
    %40 = vector.extract_strided_slice %0 {offsets = [0, 4], sizes = [8, 1], strides = [1, 1]} : vector<8x8xi32> to vector<8x1xi32>
    %41 = vector.broadcast %40 : vector<8x1xi32> to vector<8x128xi32>
    %42 = arith.cmpi eq, %41, %2 : vector<8x128xi32>
    %43 = vector.extract_strided_slice %1 {offsets = [0, 4], sizes = [8, 1], strides = [1, 1]} : vector<8x8xf32> to vector<8x1xf32>
    %cst_7 = arith.constant 0.000000e+00 : f32
    %44 = vector.shape_cast %43 : vector<8x1xf32> to vector<8x1xf32>
    %45 = vector.broadcast %44 : vector<8x1xf32> to vector<8x128xf32>
    %46 = vector.broadcast %cst_7 : f32 to vector<8x128xf32>
    %47 = arith.select %42, %45, %46 : vector<8x128xi1>, vector<8x128xf32>
    %48 = arith.addf %39, %47 : vector<8x128xf32>
    %49 = vector.extract_strided_slice %0 {offsets = [0, 5], sizes = [8, 1], strides = [1, 1]} : vector<8x8xi32> to vector<8x1xi32>
    %50 = vector.broadcast %49 : vector<8x1xi32> to vector<8x128xi32>
    %51 = arith.cmpi eq, %50, %2 : vector<8x128xi32>
    %52 = vector.extract_strided_slice %1 {offsets = [0, 5], sizes = [8, 1], strides = [1, 1]} : vector<8x8xf32> to vector<8x1xf32>
    %cst_8 = arith.constant 0.000000e+00 : f32
    %53 = vector.shape_cast %52 : vector<8x1xf32> to vector<8x1xf32>
    %54 = vector.broadcast %53 : vector<8x1xf32> to vector<8x128xf32>
    %55 = vector.broadcast %cst_8 : f32 to vector<8x128xf32>
    %56 = arith.select %51, %54, %55 : vector<8x128xi1>, vector<8x128xf32>
    %57 = arith.addf %48, %56 : vector<8x128xf32>
    %58 = vector.extract_strided_slice %0 {offsets = [0, 6], sizes = [8, 1], strides = [1, 1]} : vector<8x8xi32> to vector<8x1xi32>
    %59 = vector.broadcast %58 : vector<8x1xi32> to vector<8x128xi32>
    %60 = arith.cmpi eq, %59, %2 : vector<8x128xi32>
    %61 = vector.extract_strided_slice %1 {offsets = [0, 6], sizes = [8, 1], strides = [1, 1]} : vector<8x8xf32> to vector<8x1xf32>
    %cst_9 = arith.constant 0.000000e+00 : f32
    %62 = vector.shape_cast %61 : vector<8x1xf32> to vector<8x1xf32>
    %63 = vector.broadcast %62 : vector<8x1xf32> to vector<8x128xf32>
    %64 = vector.broadcast %cst_9 : f32 to vector<8x128xf32>
    %65 = arith.select %60, %63, %64 : vector<8x128xi1>, vector<8x128xf32>
    %66 = arith.addf %57, %65 : vector<8x128xf32>
    %67 = vector.extract_strided_slice %0 {offsets = [0, 7], sizes = [8, 1], strides = [1, 1]} : vector<8x8xi32> to vector<8x1xi32>
    %68 = vector.broadcast %67 : vector<8x1xi32> to vector<8x128xi32>
    %69 = arith.cmpi eq, %68, %2 : vector<8x128xi32>
    %70 = vector.extract_strided_slice %1 {offsets = [0, 7], sizes = [8, 1], strides = [1, 1]} : vector<8x8xf32> to vector<8x1xf32>
    %cst_10 = arith.constant 0.000000e+00 : f32
    %71 = vector.shape_cast %70 : vector<8x1xf32> to vector<8x1xf32>
    %72 = vector.broadcast %71 : vector<8x1xf32> to vector<8x128xf32>
    %73 = vector.broadcast %cst_10 : f32 to vector<8x128xf32>
    %74 = arith.select %69, %72, %73 : vector<8x128xi1>, vector<8x128xf32>
    %75 = arith.addf %66, %74 : vector<8x128xf32>
    %cst_11 = arith.constant dense<0.000000e+00> : vector<8xf32>
    %76 = vector.multi_reduction <add>, %1, %cst_11 [1] : vector<8x8xf32> to vector<8xf32>
    %77 = vector.shape_cast %76 : vector<8xf32> to vector<8x1xf32>
    %cst_12 = arith.constant 1.000000e+00 : f32
    %78 = vector.broadcast %cst_12 : f32 to vector<8x1xf32>
    %79 = arith.maximumf %77, %78 : vector<8x1xf32>
    %80 = arith.truncf %75 : vector<8x128xf32> to vector<8x128xbf16>
    %c0_13 = arith.constant 0 : index
    %c0_14 = arith.constant 0 : index
    %81 = vector.load %arg3[%c0_13, %c0_14] : memref<128x32xbf16, #tpu.memory_space<vmem>>, vector<128x32xbf16>
    %cst_15 = arith.constant dense<0.000000e+00> : vector<8x32xf32>
    %82 = tpu.matmul %80, %81, %cst_15 {dimension_numbers = #tpu.dot_dimension_numbers<[1], [0], [0], [1], [0, 0, 1, 1], [], []>} : vector<8x128xbf16>, vector<128x32xbf16>, vector<8x32xf32> -> vector<8x32xf32>
    %83 = vector.broadcast %79 : vector<8x1xf32> to vector<8x32xf32>
    %84 = arith.divf %82, %83 : vector<8x32xf32>
    %85 = arith.truncf %84 : vector<8x32xf32> to vector<8x32xbf16>
    %c0_16 = arith.constant 0 : index
    %c0_17 = arith.constant 0 : index
    %86 = vector.load %arg4[%c0_16, %c0_17] : memref<32x128xbf16, #tpu.memory_space<vmem>>, vector<32x128xbf16>
    %cst_18 = arith.constant dense<0.000000e+00> : vector<8x128xf32>
    %87 = tpu.matmul %85, %86, %cst_18 {dimension_numbers = #tpu.dot_dimension_numbers<[1], [0], [0], [1], [0, 0, 1, 1], [], []>} : vector<8x32xbf16>, vector<32x128xbf16>, vector<8x128xf32> -> vector<8x128xf32>
    %c0_19 = arith.constant 0 : index
    %c0_20 = arith.constant 0 : index
    %88 = vector.load %arg5[%c0_19, %c0_20] : memref<1x128xf32, #tpu.memory_space<vmem>>, vector<1x128xf32>
    %89 = vector.broadcast %88 : vector<1x128xf32> to vector<8x128xf32>
    %90 = arith.addf %87, %89 : vector<8x128xf32>
    %cst_21 = arith.constant 0.000000e+00 : f32
    %91 = vector.broadcast %cst_21 : f32 to vector<8x128xf32>
    %92 = arith.maximumf %90, %91 : vector<8x128xf32>
    %93 = arith.truncf %92 : vector<8x128xf32> to vector<8x128xbf16>
    %c0_22 = arith.constant 0 : index
    %c0_23 = arith.constant 0 : index
    %94 = vector.load %arg6[%c0_22, %c0_23] : memref<128x128xbf16, #tpu.memory_space<vmem>>, vector<128x128xbf16>
    %cst_24 = arith.constant dense<0.000000e+00> : vector<8x128xf32>
    %95 = tpu.matmul %93, %94, %cst_24 {dimension_numbers = #tpu.dot_dimension_numbers<[1], [0], [0], [1], [0, 0, 1, 1], [], []>} : vector<8x128xbf16>, vector<128x128xbf16>, vector<8x128xf32> -> vector<8x128xf32>
    %c0_25 = arith.constant 0 : index
    %c0_26 = arith.constant 0 : index
    %96 = vector.load %arg7[%c0_25, %c0_26] : memref<1x128xf32, #tpu.memory_space<vmem>>, vector<1x128xf32>
    %97 = vector.broadcast %96 : vector<1x128xf32> to vector<8x128xf32>
    %98 = arith.addf %95, %97 : vector<8x128xf32>
    %c0_27 = arith.constant 0 : index
    %c0_28 = arith.constant 0 : index
    %99 = vector.load %arg9[%c0_27, %c0_28] : memref<8x128xf32, #tpu.memory_space<vmem>>, vector<8x128xf32>
    tpu.vector_store %arg9[%c0_27, %c0_28], %98 {strides = array<i32>} : memref<8x128xf32, #tpu.memory_space<vmem>>, vector<8x128xf32>,
    return
  }
  func.func @transform_0(%arg0: i32) -> (i32, i32) {
    %c0_i32 = arith.constant 0 : i32
    %c0_i32_0 = arith.constant 0 : i32
    return %arg0, %c0_i32 : i32, i32
  }
  func.func @transform_1(%arg0: i32) -> (i32, i32) {
    %c0_i32 = arith.constant 0 : i32
    %c0_i32_0 = arith.constant 0 : i32
    return %arg0, %c0_i32 : i32, i32
  }
  func.func @transform_2(%arg0: i32) -> (i32, i32) {
    %c0_i32 = arith.constant 0 : i32
    %c0_i32_0 = arith.constant 0 : i32
    %c0_i32_1 = arith.constant 0 : i32
    return %c0_i32, %c0_i32_0 : i32, i32
  }
  func.func @transform_3(%arg0: i32) -> (i32, i32) {
    %c0_i32 = arith.constant 0 : i32
    %c0_i32_0 = arith.constant 0 : i32
    %c0_i32_1 = arith.constant 0 : i32
    return %c0_i32, %c0_i32_0 : i32, i32
  }
  func.func @transform_4(%arg0: i32) -> (i32, i32) {
    %c0_i32 = arith.constant 0 : i32
    %c0_i32_0 = arith.constant 0 : i32
    %c0_i32_1 = arith.constant 0 : i32
    return %c0_i32, %c0_i32_0 : i32, i32
  }
  func.func @transform_5(%arg0: i32) -> (i32, i32) {
    %c0_i32 = arith.constant 0 : i32
    %c0_i32_0 = arith.constant 0 : i32
    %c0_i32_1 = arith.constant 0 : i32
    return %c0_i32, %c0_i32_0 : i32, i32
  }
  func.func @transform_6(%arg0: i32) -> (i32, i32) {
    %c0_i32 = arith.constant 0 : i32
    %c0_i32_0 = arith.constant 0 : i32
    %c0_i32_1 = arith.constant 0 : i32
    return %c0_i32, %c0_i32_0 : i32, i32
  }
  func.func @transform_7(%arg0: i32) -> i32 {
    %c0_i32 = arith.constant 0 : i32
    %c0_i32_0 = arith.constant 0 : i32
    return %c0_i32 : i32
  }
  func.func @transform_8(%arg0: i32) -> (i32, i32) {
    %c0_i32 = arith.constant 0 : i32
    %c0_i32_0 = arith.constant 0 : i32
    return %arg0, %c0_i32 : i32, i32
  }
}

</mosaic_0001>

<llo_original>
// kernel: tpu_custom_call.1
$region0: #{tpu_custom_call.1}
  #allocation0 [shape = 'u32[]', space=smem, size = 0x4, offset = 0x4, fixed_abs, tag = 'smem constant byte address 0x4 - core index']
  #allocation1 [shape = 'u32[144,128]{1,0:T(1,128)}', space=vmem, size = 0x12000, scoped, tag = 'internal scratch']
  #allocation2 [shape = 's32[1]{0:T(128)S(6)}', space=smem, size = 0x200, scoped, tag = 'scoped memory for tpu_custom_call.1']
  %s0 = inlined_call_operand.vmem [shape: s32[8,8], index: 0, kind: input, shape index: {}]
  %s1 = inlined_call_operand.vmem [shape: f32[8,8], index: 1, kind: input, shape index: {}]
  %s2 = inlined_call_operand.vmem [shape: bf16[128,32], index: 2, kind: input, shape index: {}]
  %s3 = inlined_call_operand.vmem [shape: bf16[32,128], index: 3, kind: input, shape index: {}]
  %s4 = inlined_call_operand.vmem [shape: f32[1,128], index: 4, kind: input, shape index: {}]
  %s5 = inlined_call_operand.vmem [shape: bf16[128,128], index: 5, kind: input, shape index: {}]
  %s6 = inlined_call_operand.vmem [shape: f32[1,128], index: 6, kind: input, shape index: {}]
  %s7 = inlined_call_operand.<no memory space> [shape: s32[1], index: 7, kind: input, shape index: {}]
  %s8 = inlined_call_operand.hbm [shape: f32[8,128], index: 8, kind: output, shape index: {}]
  %s9 = sld [smem:[#allocation0]]
  $region42: #{tpu_custom_call.1} parent=0
    _
  %s11 = ssub.s32 1, %s9
  %s12 = scalar_select 0, %s11, %s9
  %13 = sst [smem:[#allocation2]] %s7
  $region1: #{tpu_custom_call.1} parent=0
    #allocation3 [shape = 'u8[4096]{0}', space=vmem, size = 0x1000, scoped, tag = 'output window, operand 0, single buffered']
    #allocation4 [shape = 's32[1]{0}', space=sflag, size = 0x4, scoped, tag = 'scoped memory for tpu_custom_call.1']
    %14 = vsyncpa [#allocation4], 0
    // Predicated region
    $region2: #{tpu_custom_call.1} parent=1 // pred_check
      _
    $region3: #{tpu_custom_call.1} parent=1 // pred_check_branch
      %16 = sbr.rel (0) target = $region5
    $region4: #{tpu_custom_call.1} parent=1 // pred_region
      _
    $region5: #{tpu_custom_call.1} parent=1 // pred_fallthru
      _
    // Predicated region
    $region6: #{tpu_custom_call.1} parent=1 // pred_check
      _
    $region7: #{tpu_custom_call.1} parent=1 // pred_check_branch
      %18 = sbr.rel (0) target = $region9
    $region8: #{tpu_custom_call.1} parent=1 // pred_region
      _
    $region9: #{tpu_custom_call.1} parent=1 // pred_fallthru
      _
    // Predicated region
    $region10: #{tpu_custom_call.1} parent=1 // pred_check
      _
    $region11: #{tpu_custom_call.1} parent=1 // pred_check_branch
      %20 = sbr.rel (0) target = $region13
    $region12: #{tpu_custom_call.1} parent=1 // pred_region
      _
    $region13: #{tpu_custom_call.1} parent=1 // pred_fallthru
      _
    // Predicated region
    $region14: #{tpu_custom_call.1} parent=1 // pred_check
      _
    $region15: #{tpu_custom_call.1} parent=1 // pred_check_branch
      %22 = sbr.rel (0) target = $region17
    $region16: #{tpu_custom_call.1} parent=1 // pred_region
      _
    $region17: #{tpu_custom_call.1} parent=1 // pred_fallthru
      _
    // Predicated region
    $region18: #{tpu_custom_call.1} parent=1 // pred_check
      _
    $region19: #{tpu_custom_call.1} parent=1 // pred_check_branch
      %24 = sbr.rel (0) target = $region21
    $region20: #{tpu_custom_call.1} parent=1 // pred_region
      _
    $region21: #{tpu_custom_call.1} parent=1 // pred_fallthru
      _
    // Predicated region
    $region22: #{tpu_custom_call.1} parent=1 // pred_check
      _
    $region23: #{tpu_custom_call.1} parent=1 // pred_check_branch
      %26 = sbr.rel (0) target = $region25
    $region24: #{tpu_custom_call.1} parent=1 // pred_region
      _
    $region25: #{tpu_custom_call.1} parent=1 // pred_fallthru
      _
    // Predicated region
    $region26: #{tpu_custom_call.1} parent=1 // pred_check
      _
    $region27: #{tpu_custom_call.1} parent=1 // pred_check_branch
      %28 = sbr.rel (0) target = $region29
    $region28: #{tpu_custom_call.1} parent=1 // pred_region
      _
    $region29: #{tpu_custom_call.1} parent=1 // pred_fallthru
      _
    // Predicated region
    $region30: #{tpu_custom_call.1} parent=1 // pred_check
      _
    $region31: #{tpu_custom_call.1} parent=1 // pred_check_branch
      %30 = sbr.rel (0) target = $region33
    $region32: #{tpu_custom_call.1} parent=1 // pred_region
      _
    $region33: #{tpu_custom_call.1} parent=1 // pred_fallthru
      _
    %v32 = vld [vmem:[%s0] sm:$0xff]
    %v33 = vld [vmem:[%s1] sm:$0xff]
    %v34 = vlaneseq
    %v35 = vand.u32 %v34, 127
    %36 = vset.pattern.permute.xlu0 0
    %37 = vperm.xlu0 %36, %v32
    %v38 = vpop.permute.xlu0 %37
    %vm39 = vcmp.eq.s32.totalorder %v38, %v35
    %41 = vset.pattern.permute.xlu0 0
    %42 = vperm.xlu0 %41, %v33
    %v43 = vpop.permute.xlu0 %42
    %v45 = vsel %vm39, %v43, 0.0
    %v46 = vadd.f32 %v45, 0.0
    %47 = vset.pattern.permute.xlu0 1
    %48 = vperm.xlu0 %47, %v32
    %v49 = vpop.permute.xlu0 %48
    %vm50 = vcmp.eq.s32.totalorder %v49, %v35
    %51 = vset.pattern.permute.xlu0 1
    %52 = vperm.xlu0 %51, %v33
    %v53 = vpop.permute.xlu0 %52
    %v55 = vsel %vm50, %v53, 0.0
    %v56 = vadd.f32 %v46, %v55
    %57 = vset.pattern.permute.xlu0 2
    %58 = vperm.xlu0 %57, %v32
    %v59 = vpop.permute.xlu0 %58
    %vm60 = vcmp.eq.s32.totalorder %v59, %v35
    %61 = vset.pattern.permute.xlu0 2
    %62 = vperm.xlu0 %61, %v33
    %v63 = vpop.permute.xlu0 %62
    %v65 = vsel %vm60, %v63, 0.0
    %v66 = vadd.f32 %v56, %v65
    %67 = vset.pattern.permute.xlu0 3
    %68 = vperm.xlu0 %67, %v32
    %v69 = vpop.permute.xlu0 %68
    %vm70 = vcmp.eq.s32.totalorder %v69, %v35
    %71 = vset.pattern.permute.xlu0 3
    %72 = vperm.xlu0 %71, %v33
    %v73 = vpop.permute.xlu0 %72
    %v75 = vsel %vm70, %v73, 0.0
    %v76 = vadd.f32 %v66, %v75
    %77 = vset.pattern.permute.xlu0 4
    %78 = vperm.xlu0 %77, %v32
    %v79 = vpop.permute.xlu0 %78
    %vm80 = vcmp.eq.s32.totalorder %v79, %v35
    %81 = vset.pattern.permute.xlu0 4
    %82 = vperm.xlu0 %81, %v33
    %v83 = vpop.permute.xlu0 %82
    %v85 = vsel %vm80, %v83, 0.0
    %v86 = vadd.f32 %v76, %v85
    %87 = vset.pattern.permute.xlu0 5
    %88 = vperm.xlu0 %87, %v32
    %v89 = vpop.permute.xlu0 %88
    %vm90 = vcmp.eq.s32.totalorder %v89, %v35
    %91 = vset.pattern.permute.xlu0 5
    %92 = vperm.xlu0 %91, %v33
    %v93 = vpop.permute.xlu0 %92
    %v95 = vsel %vm90, %v93, 0.0
    %v96 = vadd.f32 %v86, %v95
    %97 = vset.pattern.permute.xlu0 6
    %98 = vperm.xlu0 %97, %v32
    %v99 = vpop.permute.xlu0 %98
    %vm100 = vcmp.eq.s32.totalorder %v99, %v35
    %101 = vset.pattern.permute.xlu0 6
    %102 = vperm.xlu0 %101, %v33
    %v103 = vpop.permute.xlu0 %102
    %v105 = vsel %vm100, %v103, 0.0
    %v106 = vadd.f32 %v96, %v105
    %107 = vset.pattern.permute.xlu0 7
    %108 = vperm.xlu0 %107, %v32
    %v109 = vpop.permute.xlu0 %108
    %vm110 = vcmp.eq.s32.totalorder %v109, %v35
    %111 = vset.pattern.permute.xlu0 7
    %112 = vperm.xlu0 %111, %v33
    %v113 = vpop.permute.xlu0 %112
    %v115 = vsel %vm110, %v113, 0.0
    %v116 = vadd.f32 %v106, %v115
    %vm117 = vcmask 64512
    %v118 = vsel %vm117, %v33, 0.0
    %119 = vadd.xlane.f32.xlu0 %v118
    %v120 = vpop.xlane.xlu0 %119
    %v121 = vmax.f32 %v120, 1.0
    %v122 = vpack.c.bf16 %v116, %v116
    %v123 = vld [vmem:[%s2] sm:$0xf]
    %v124 = vld [vmem:[%s2 + $0x4] sm:$0xf]
    %v125 = vld [vmem:[%s2 + $0x8] sm:$0xf]
    %v126 = vld [vmem:[%s2 + $0xc] sm:$0xf]
    %v127 = vld [vmem:[%s2 + $0x10] sm:$0xf]
    %v128 = vld [vmem:[%s2 + $0x14] sm:$0xf]
    %v129 = vld [vmem:[%s2 + $0x18] sm:$0xf]
    %v130 = vld [vmem:[%s2 + $0x1c] sm:$0xf]
    %v131 = vld [vmem:[%s2 + $0x20] sm:$0xf]
    %v132 = vld [vmem:[%s2 + $0x24] sm:$0xf]
    %v133 = vld [vmem:[%s2 + $0x28] sm:$0xf]
    %v134 = vld [vmem:[%s2 + $0x2c] sm:$0xf]
    %v135 = vld [vmem:[%s2 + $0x30] sm:$0xf]
    %v136 = vld [vmem:[%s2 + $0x34] sm:$0xf]
    %v137 = vld [vmem:[%s2 + $0x38] sm:$0xf]
    %v138 = vld [vmem:[%s2 + $0x3c] sm:$0xf]
    %v155 = vunpack.c.l.b16 %v123
    %v156 = vunpack.c.l.b16 %v124
    %v157 = vunpack.c.l.b16 %v125
    %v158 = vunpack.c.l.b16 %v126
    %v159 = vunpack.c.l.b16 %v127
    %v160 = vunpack.c.l.b16 %v128
    %v161 = vunpack.c.l.b16 %v129
    %v162 = vunpack.c.l.b16 %v130
    %v163 = vunpack.c.l.b16 %v131
    %v164 = vunpack.c.l.b16 %v132
    %v165 = vunpack.c.l.b16 %v133
    %v166 = vunpack.c.l.b16 %v134
    %v167 = vunpack.c.l.b16 %v135
    %v168 = vunpack.c.l.b16 %v136
    %v169 = vunpack.c.l.b16 %v137
    %v170 = vunpack.c.l.b16 %v138
    %v171 = vpack.c.b16 %v156, %v155
    %v172 = vpack.c.b16 %v158, %v157
    %v173 = vpack.c.b16 %v160, %v159
    %v174 = vpack.c.b16 %v162, %v161
    %v175 = vpack.c.b16 %v164, %v163
    %v176 = vpack.c.b16 %v166, %v165
    %v177 = vpack.c.b16 %v168, %v167
    %v178 = vpack.c.b16 %v170, %v169
    %187 = vmatprep.subr.bf16.mxu0 0
    %188 = vmatpush1.bf16.msra.mxu0 %v171
    %189 = vmatprep.subr.bf16.mxu0 0
    %190 = vmatpush1.bf16.msra.mxu0 %v172
    %191 = vmatprep.subr.bf16.mxu0 0
    %192 = vmatpush1.bf16.msra.mxu0 %v173
    %193 = vmatprep.subr.bf16.mxu0 0
    %194 = vmatpush1.bf16.msra.mxu0 %v174
    %195 = vmatprep.subr.bf16.mxu0 0
    %196 = vmatpush1.bf16.msra.mxu0 %v175
    %197 = vmatprep.subr.bf16.mxu0 0
    %198 = vmatpush1.bf16.msra.mxu0 %v176
    %199 = vmatprep.subr.bf16.mxu0 0
    %200 = vmatpush1.bf16.msra.mxu0 %v177
    %201 = vmatprep.subr.bf16.mxu0 0
    %202 = vmatpush1.bf16.msra.mxu0 %v178
    %203 = vmatprep.subr.bf16.mxu0 0
    %204 = vmatpush1.bf16.msra.mxu0 0
    %205 = vmatprep.subr.bf16.mxu0 0
    %206 = vmatpush1.bf16.msra.mxu0 0
    %207 = vmatprep.subr.bf16.mxu0 0
    %208 = vmatpush1.bf16.msra.mxu0 0
    %209 = vmatprep.subr.bf16.mxu0 0
    %210 = vmatpush1.bf16.msra.mxu0 0
    %211 = vmatprep.subr.bf16.mxu0 0
    %212 = vmatpush1.bf16.msra.mxu0 0
    %213 = vmatprep.subr.bf16.mxu0 0
    %214 = vmatpush1.bf16.msra.mxu0 0
    %215 = vmatprep.subr.bf16.mxu0 0
    %216 = vmatpush1.bf16.msra.mxu0 0
    %217 = vmatprep.subr.bf16.mxu0 0
    %218 = vmatpush1.bf16.msra.mxu0 0
    %219 = vmatprep.mubr.bf16.mxu0 0
    %220 = vmatmul.mubr.bf16.gmra.mrb[0].mxu0 %v122
    %v221 = vpop.f32.mrb[0].mxu0
    %v222 = vadd.f32 0.0, %v221
    %v223 = vpop.f32.mrb[0].mxu0
    %v224 = vpop.f32.mrb[0].mxu0
    %v225 = vpop.f32.mrb[0].mxu0
    %226 = vdwg.mxu0
    %v227 = vrcp.pop %v121
    %v228 = vmul.f32 %v222, %v227
    %v229 = vpack.c.bf16 %v228, %v228
    %v230 = vld [vmem:[%s3] sm:$0xf]
    %v231 = vld [vmem:[%s3 + $0x4] sm:$0xf]
    %v232 = vld [vmem:[%s3 + $0x8] sm:$0xf]
    %v233 = vld [vmem:[%s3 + $0xc] sm:$0xf]
    %v234 = vld [vmem:[%s4] sm:$0x1]
    %v236 = vlaneseq
    %v237 = vshrl.u32 %v236, 7
    %v238 = vsub.s32 0, %v237
    %v239 = vrot.slane %v234, %v238
    %v245 = vunpack.c.l.b16 %v230
    %v246 = vunpack.c.l.b16 %v231
    %v247 = vunpack.c.l.b16 %v232
    %v248 = vunpack.c.l.b16 %v233
    %v249 = vpack.c.b16 %v246, %v245
    %v250 = vpack.c.b16 %v248, %v247
    %vm253 = vcmask 261120
    %v255 = vsel %vm253, %v229, 0
    %257 = vmatprep.subr.bf16.mxu0 0
    %258 = vmatpush1.bf16.msra.mxu0 %v249
    %259 = vmatprep.subr.bf16.mxu0 0
    %260 = vmatpush1.bf16.msra.mxu0 %v250
    %261 = vmatprep.subr.bf16.mxu0 0
    %262 = vmatpush1.bf16.msra.mxu0 0
    %263 = vmatprep.subr.bf16.mxu0 0
    %264 = vmatpush1.bf16.msra.mxu0 0
    %265 = vmatprep.subr.bf16.mxu0 0
    %266 = vmatpush1.bf16.msra.mxu0 0
    %267 = vmatprep.subr.bf16.mxu0 0
    %268 = vmatpush1.bf16.msra.mxu0 0
    %269 = vmatprep.subr.bf16.mxu0 0
    %270 = vmatpush1.bf16.msra.mxu0 0
    %271 = vmatprep.subr.bf16.mxu0 0
    %272 = vmatpush1.bf16.msra.mxu0 0
    %273 = vmatprep.subr.bf16.mxu0 0
    %274 = vmatpush1.bf16.msra.mxu0 0
    %275 = vmatprep.subr.bf16.mxu0 0
    %276 = vmatpush1.bf16.msra.mxu0 0
    %277 = vmatprep.subr.bf16.mxu0 0
    %278 = vmatpush1.bf16.msra.mxu0 0
    %279 = vmatprep.subr.bf16.mxu0 0
    %280 = vmatpush1.bf16.msra.mxu0 0
    %281 = vmatprep.subr.bf16.mxu0 0
    %282 = vmatpush1.bf16.msra.mxu0 0
    %283 = vmatprep.subr.bf16.mxu0 0
    %284 = vmatpush1.bf16.msra.mxu0 0
    %285 = vmatprep.subr.bf16.mxu0 0
    %286 = vmatpush1.bf16.msra.mxu0 0
    %287 = vmatprep.subr.bf16.mxu0 0
    %288 = vmatpush1.bf16.msra.mxu0 0
    %289 = vmatprep.mubr.bf16.mxu0 0
    %290 = vmatmul.mubr.bf16.gmra.mrb[0].mxu0 %v255
    %v291 = vpop.f32.mrb[0].mxu0
    %v292 = vadd.f32 %v239, %v291
    %v293 = vpop.f32.mrb[0].mxu0
    %v294 = vpop.f32.mrb[0].mxu0
    %v295 = vpop.f32.mrb[0].mxu0
    %296 = vdwg.mxu0
    %v297 = vmax.f32 %v292, 0.0
    %v298 = vpack.c.bf16 %v297, %v297
    %v299 = vld [vmem:[%s5] sm:$0xf]
    %v300 = vld [vmem:[%s5 + $0x4] sm:$0xf]
    %v301 = vld [vmem:[%s5 + $0x8] sm:$0xf]
    %v302 = vld [vmem:[%s5 + $0xc] sm:$0xf]
    %v303 = vld [vmem:[%s5 + $0x10] sm:$0xf]
    %v304 = vld [vmem:[%s5 + $0x14] sm:$0xf]
    %v305 = vld [vmem:[%s5 + $0x18] sm:$0xf]
    %v306 = vld [vmem:[%s5 + $0x1c] sm:$0xf]
    %v307 = vld [vmem:[%s5 + $0x20] sm:$0xf]
    %v308 = vld [vmem:[%s5 + $0x24] sm:$0xf]
    %v309 = vld [vmem:[%s5 + $0x28] sm:$0xf]
    %v310 = vld [vmem:[%s5 + $0x2c] sm:$0xf]
    %v311 = vld [vmem:[%s5 + $0x30] sm:$0xf]
    %v312 = vld [vmem:[%s5 + $0x34] sm:$0xf]
    %v313 = vld [vmem:[%s5 + $0x38] sm:$0xf]
    %v314 = vld [vmem:[%s5 + $0x3c] sm:$0xf]
    %v315 = vld [vmem:[%s6] sm:$0x1]
    %v317 = vlaneseq
    %v318 = vshrl.u32 %v317, 7
    %v319 = vsub.s32 0, %v318
    %v320 = vrot.slane %v315, %v319
    %v338 = vunpack.c.l.b16 %v299
    %v339 = vunpack.c.l.b16 %v300
    %v340 = vunpack.c.l.b16 %v301
    %v341 = vunpack.c.l.b16 %v302
    %v342 = vunpack.c.l.b16 %v303
    %v343 = vunpack.c.l.b16 %v304
    %v344 = vunpack.c.l.b16 %v305
    %v345 = vunpack.c.l.b16 %v306
    %v346 = vunpack.c.l.b16 %v307
    %v347 = vunpack.c.l.b16 %v308
    %v348 = vunpack.c.l.b16 %v309
    %v349 = vunpack.c.l.b16 %v310
    %v350 = vunpack.c.l.b16 %v311
    %v351 = vunpack.c.l.b16 %v312
    %v352 = vunpack.c.l.b16 %v313
    %v353 = vunpack.c.l.b16 %v314
    %v354 = vpack.c.b16 %v339, %v338
    %v355 = vpack.c.b16 %v341, %v340
    %v356 = vpack.c.b16 %v343, %v342
    %v357 = vpack.c.b16 %v345, %v344
    %v358 = vpack.c.b16 %v347, %v346
    %v359 = vpack.c.b16 %v349, %v348
    %v360 = vpack.c.b16 %v351, %v350
    %v361 = vpack.c.b16 %v353, %v352
    %370 = vmatprep.subr.bf16.mxu0 0
    %371 = vmatpush1.bf16.msra.mxu0 %v354
    %372 = vmatprep.subr.bf16.mxu0 0
    %373 = vmatpush1.bf16.msra.mxu0 %v355
    %374 = vmatprep.subr.bf16.mxu0 0
    %375 = vmatpush1.bf16.msra.mxu0 %v356
    %376 = vmatprep.subr.bf16.mxu0 0
    %377 = vmatpush1.bf16.msra.mxu0 %v357
    %378 = vmatprep.subr.bf16.mxu0 0
    %379 = vmatpush1.bf16.msra.mxu0 %v358
    %380 = vmatprep.subr.bf16.mxu0 0
    %381 = vmatpush1.bf16.msra.mxu0 %v359
    %382 = vmatprep.subr.bf16.mxu0 0
    %383 = vmatpush1.bf16.msra.mxu0 %v360
    %384 = vmatprep.subr.bf16.mxu0 0
    %385 = vmatpush1.bf16.msra.mxu0 %v361
    %386 = vmatprep.subr.bf16.mxu0 0
    %387 = vmatpush1.bf16.msra.mxu0 0
    %388 = vmatprep.subr.bf16.mxu0 0
    %389 = vmatpush1.bf16.msra.mxu0 0
    %390 = vmatprep.subr.bf16.mxu0 0
    %391 = vmatpush1.bf16.msra.mxu0 0
    %392 = vmatprep.subr.bf16.mxu0 0
    %393 = vmatpush1.bf16.msra.mxu0 0
    %394 = vmatprep.subr.bf16.mxu0 0
    %395 = vmatpush1.bf16.msra.mxu0 0
    %396 = vmatprep.subr.bf16.mxu0 0
    %397 = vmatpush1.bf16.msra.mxu0 0
    %398 = vmatprep.subr.bf16.mxu0 0
    %399 = vmatpush1.bf16.msra.mxu0 0
    %400 = vmatprep.subr.bf16.mxu0 0
    %401 = vmatpush1.bf16.msra.mxu0 0
    %402 = vmatprep.mubr.bf16.mxu0 0
    %403 = vmatmul.mubr.bf16.gmra.mrb[0].mxu0 %v298
    %v404 = vpop.f32.mrb[0].mxu0
    %v405 = vadd.f32 %v320, %v404
    %v406 = vpop.f32.mrb[0].mxu0
    %v407 = vpop.f32.mrb[0].mxu0
    %v408 = vpop.f32.mrb[0].mxu0
    %409 = vdwg.mxu0
    %410 = vst [vmem:[#allocation3] sm:$0xff] %v405
    // Predicated region
    $region34: #{tpu_custom_call.1} parent=1 // pred_check
      _
    $region35: #{tpu_custom_call.1} parent=1 // pred_check_branch
      %412 = sbr.rel (0) target = $region37
    $region36: #{tpu_custom_call.1} parent=1 // pred_region
      %s414 = ssub.s32 128, 128
      %415 = vsyncadd [#allocation4], %s414
      %s417 = sshll.u32 [#allocation3], 4
      %s418 = int_to_ptr.vmem [resolvable:$true] %s417
      %420 = dma.vmem_to_hbm [thread:$0]  %s418, 128, %s8, [#allocation4]
    $region37: #{tpu_custom_call.1} parent=1 // pred_fallthru
      _
    // Predicated region
    $region38: #{tpu_custom_call.1} parent=1 // pred_check
      _
    $region39: #{tpu_custom_call.1} parent=1 // pred_check_branch
      %422 = sbr.rel (0) target = $region41
    $region40: #{tpu_custom_call.1} parent=1 // pred_region
      %423 = dma.done [#allocation4], 128
    $region41: #{tpu_custom_call.1} parent=1 // pred_fallthru
      _
    %424 = vsyncpa [#allocation4], 1

</llo_original>
